<compile_context>
chip_gen: v7x
topology: tpu7x:2x2x1
jax: 0.10.0
libtpu: 0.0.40
codegen_flags: <defaults>
</compile_context>

<pallas_src>
import functools

import jax
import jax.numpy as jnp
from jax import lax
from jax.experimental import pallas as pl
from jax.experimental.pallas import tpu as pltpu

_OUT_LANES = 128  # lane-dense scalar slab -> unmasked vector stores


def _round_up(v, m):
    return ((v + m - 1) // m) * m


def _tcl_kernel(x_ref, tgt_ref, ctm2_ref, c2_ref, present_ref,
                loss_ref, prec_ref, dap2_ref, dan2_ref, *,
                margin, inv_batch, use_bf16):
    j = pl.program_id(1)
    n_j = pl.num_programs(1)

    @pl.when(j == 0)
    def _():
        dap2_ref[...] = jnp.full(dap2_ref.shape, -jnp.inf, dap2_ref.dtype)
        dan2_ref[...] = jnp.full(dan2_ref.shape, jnp.inf, dan2_ref.dtype)

    x = x_ref[...]                       # (TB, D)  f32
    tgt = tgt_ref[...]                   # (TB, 1)  int32 (-1 marks padded rows)
    ctm2 = ctm2_ref[...]                 # (D, TC)  -2 * centers^T (f32 or bf16)
    c2 = c2_ref[...]                     # (1, TC)  f32, hoisted to wrapper
    present = present_ref[...] > 0       # (1, TC)  class appears in the batch

    tb = x.shape[0]
    tc = ctm2.shape[1]

    # cross = -2 * x . c   (the -2 is already folded into the centers operand)
    if use_bf16:
        cross = jnp.dot(x.astype(jnp.bfloat16), ctm2,
                        preferred_element_type=jnp.float32)
    else:
        cross = jnp.dot(x, ctm2, preferred_element_type=jnp.float32)  # (TB, TC)

    # x^2 is constant per row -> added after the reductions (monotone invariant).
    part = c2 + cross                                             # (TB, TC)

    class_ids = j * tc + lax.broadcasted_iota(jnp.int32, (tb, tc), dimension=1)
    is_own = tgt == class_ids                                     # (TB, TC)
    is_other = jnp.logical_and(present, jnp.logical_not(is_own))

    neg_inf = jnp.float32(-jnp.inf)
    pos_inf = jnp.float32(jnp.inf)
    dap2_ref[...] = jnp.maximum(
        dap2_ref[...],
        jnp.max(jnp.where(is_own, part, neg_inf), axis=1, keepdims=True))
    dan2_ref[...] = jnp.minimum(
        dan2_ref[...],
        jnp.min(jnp.where(is_other, part, pos_inf), axis=1, keepdims=True))

    @pl.when(j == n_j - 1)
    def _():
        x2 = jnp.sum(x * x, axis=1, keepdims=True)                # (TB, 1)
        valid = tgt >= 0                                          # (TB, 1) bool
        d_ap = jnp.sqrt(jnp.maximum(dap2_ref[...] + x2, jnp.float32(1e-12)))
        d_an = jnp.sqrt(jnp.maximum(dan2_ref[...] + x2, jnp.float32(1e-12)))
        # MarginRankingLoss(d_an, d_ap, y=1) = mean(relu(d_ap - d_an + margin));
        # padded rows are excluded via where() so inf never multiplies 0.
        hinge = jnp.where(valid,
                          jnp.maximum(d_ap - d_an + jnp.float32(margin), 0.0),
                          jnp.float32(0.0))
        diff = jnp.where(valid, d_an - d_ap, jnp.float32(0.0))

        loss_part = jnp.sum(hinge) * jnp.float32(inv_batch)       # scalar
        prec_part = jnp.sum(diff) * jnp.float32(inv_batch)        # scalar

        row0 = lax.broadcasted_iota(jnp.int32, (8, _OUT_LANES), 0) == 0
        col0 = lax.broadcasted_iota(jnp.int32, (8, _OUT_LANES), 1) == 0
        at00 = jnp.logical_and(row0, col0)
        loss_ref[...] = jnp.where(at00, loss_part, jnp.float32(0.0))
        prec_ref[...] = jnp.where(at00, prec_part, jnp.float32(0.0))


def triplet_center_loss(inputs, targets, centers, margin=0.0, l2norm=False, *,
                        row_tile=256, class_tile=2048, use_bf16_matmul=False):
    """Forward pass of TripletCenterLoss. Returns (loss, prec) float32 scalars."""
    if l2norm:
        # TODO(synk): l2norm=True path (F.normalize over the stacked dim=1) not implemented.
        raise NotImplementedError("l2norm=True not supported")

    inputs = jnp.asarray(inputs, jnp.float32)
    centers = jnp.asarray(centers, jnp.float32)
    targets = jnp.asarray(targets, jnp.int32)

    b, d = inputs.shape
    c = centers.shape[0]

    # ---- feature / class padding: lane-dense MXU operands ----
    d_pad = _round_up(d, 128)
    c_aligned = _round_up(c, 256)
    if c_aligned <= class_tile:
        tc, c_pad = c_aligned, c_aligned               # single class tile
    else:
        tc = class_tile
        c_pad = _round_up(c, tc)
    num_c_tiles = c_pad // tc

    # ---- row tiling: >=2 tiles for moderate B so both v7x TCs get work ----
    if b <= 8:
        tb = _round_up(b, 8)
    elif b <= 2 * row_tile:
        tb = _round_up((b + 1) // 2, 8)
    else:
        tb = row_tile
    b_pad = _round_up(b, tb)
    num_row_tiles = b_pad // tb

    x_p = inputs
    if b_pad != b or d_pad != d:
        x_p = jnp.pad(inputs, ((0, b_pad - b), (0, d_pad - d)))
    tgt_p = targets
    if b_pad != b:
        tgt_p = jnp.pad(targets, ((0, b_pad - b),), constant_values=-1)
    tgt_col = tgt_p[:, None]                                          # (B_pad, 1)

    centers_p = centers
    if c_pad != c or d_pad != d:
        centers_p = jnp.pad(centers, ((0, c_pad - c), (0, d_pad - d)))

    # ---- grid-invariant work hoisted out of the kernel ----
    c2 = jnp.sum(centers_p * centers_p, axis=1)[None, :]              # (1, C_pad)
    ctm2 = jnp.float32(-2.0) * centers_p.T                            # (D_pad, C_pad)
    if use_bf16_matmul:
        ctm2 = ctm2.astype(jnp.bfloat16)                              # pre-cast once
    class_ids = jnp.arange(c_pad, dtype=jnp.int32)
    present = jnp.any(targets[:, None] == class_ids[None, :],
                      axis=0).astype(jnp.int32)[None, :]              # (1, C_pad)

    # ---- explicit VMEM budget (double-buffered blocks + scratch + headroom) ----
    ct_item = 2 if use_bf16_matmul else 4
    block_bytes = (2 * tb * d_pad * 4          # x
                   + 2 * tb * 128 * 4          # targets (lane-padded)
                   + 2 * d_pad * tc * ct_item  # centers operand
                   + 2 * 2 * 8 * tc * 4        # c2 + present (sublane-padded)
                   + 2 * 2 * 8 * _OUT_LANES * 4
                   + 2 * tb * 128 * 4)         # accumulator scratch (lane-padded)
    vmem_limit = min(max(block_bytes + (4 << 20), 32 << 20), 128 << 20)

    kernel = functools.partial(_tcl_kernel, margin=float(margin),
                               inv_batch=1.0 / float(b),
                               use_bf16=use_bf16_matmul)

    loss_parts, prec_parts = pl.pallas_call(
        kernel,
        grid=(num_row_tiles, num_c_tiles),
        out_shape=(
            jax.ShapeDtypeStruct((num_row_tiles * 8, _OUT_LANES), jnp.float32),
            jax.ShapeDtypeStruct((num_row_tiles * 8, _OUT_LANES), jnp.float32),
        ),
        in_specs=[
            pl.BlockSpec((tb, d_pad), lambda i, j: (i, 0)),   # row tile of inputs
            pl.BlockSpec((tb, 1), lambda i, j: (i, 0)),       # row tile of targets
            pl.BlockSpec((d_pad, tc), lambda i, j: (0, j)),   # class tile of -2*centers^T
            pl.BlockSpec((1, tc), lambda i, j: (0, j)),       # class tile of c^2
            pl.BlockSpec((1, tc), lambda i, j: (0, j)),       # class tile of presence mask
        ],
        out_specs=(
            pl.BlockSpec((8, _OUT_LANES), lambda i, j: (i, 0)),
            pl.BlockSpec((8, _OUT_LANES), lambda i, j: (i, 0)),
        ),
        scratch_shapes=[
            pltpu.VMEM((tb, 1), jnp.float32),   # running max of d_ap^2 - x^2
            pltpu.VMEM((tb, 1), jnp.float32),   # running min of d_an^2 - x^2
        ],
        compiler_params=pltpu.CompilerParams(
            dimension_semantics=("parallel", "arbitrary"),
            vmem_limit_bytes=int(vmem_limit),
        ),
    )(x_p, tgt_col, ctm2, c2, present)

    loss = jnp.sum(loss_parts)
    prec = jnp.sum(prec_parts)
    return loss, prec


def _reference(inputs, targets, centers, margin=0.0):
    # Pure-JAX mirror of the PyTorch forward for correctness checking.
    cb = centers[targets]                                          # (B, D)
    diff = inputs[:, None, :] - cb[None, :, :]                     # (B, B, D)
    dist = jnp.sqrt(jnp.maximum(jnp.sum(diff * diff, axis=-1), 1e-12))
    mask = targets[:, None] == targets[None, :]
    d_ap = jnp.max(jnp.where(mask, dist, -jnp.inf), axis=1)
    d_an = jnp.min(jnp.where(mask, jnp.inf, dist), axis=1)
    loss = jnp.mean(jnp.maximum(d_ap - d_an + margin, 0.0))
    prec = jnp.sum(d_an - d_ap) / inputs.shape[0]
    return loss, prec


if __name__ == "__main__":
    # Module hyperparams (defaults): margin=0, center_embed=10, num_classes=10, l2norm=False
    center_embed = 10
    num_classes = 10
    key = jax.random.PRNGKey(0)
    k_in, k_centers, k_in2 = jax.random.split(key, 3)
    # Deterministic stand-in for torch.randn(num_classes, center_embed)
    centers = jax.random.normal(k_centers, (num_classes, center_embed), dtype=jnp.float32)

    # Case 1: shipped tiny shape (B=8), single row tile.
    inputs_a = jax.random.normal(k_in, (8, center_embed), dtype=jnp.float32)
    targets_a = jnp.array([0, 1, 2, 3, 0, 1, 2, 3], dtype=jnp.int32)
    # Case 2: B=20 -> two row tiles with padded rows (exercises the NaN fix).
    inputs_b = jax.random.normal(k_in2, (20, center_embed), dtype=jnp.float32)
    targets_b = (jnp.arange(20, dtype=jnp.int32) % num_classes)

    for (inp, tgt) in ((inputs_a, targets_a), (inputs_b, targets_b)):
        for margin in (0.0, 0.3):
            loss, prec = triplet_center_loss(inp, tgt, centers, margin=margin)
            loss = jax.block_until_ready(loss)
            prec = jax.block_until_ready(prec)
            ref_loss, ref_prec = _reference(inp, tgt, centers, margin=margin)
            assert jnp.isfinite(loss) and jnp.isfinite(prec), (margin, loss, prec)
            assert jnp.allclose(loss, ref_loss, atol=1e-4, rtol=1e-4), (margin, loss, ref_loss)
            assert jnp.allclose(prec, ref_prec, atol=1e-4, rtol=1e-4), (margin, prec, ref_prec)

    print("KERNEL_OK")
</pallas_src>

<mosaic_0001>
module attributes {stable_mosaic.version = 11 : i64} {
  func.func @_tcl_kernel(%arg0: i32, %arg1: i32, %arg2: memref<8x128xf32, #tpu.memory_space<vmem>>, %arg3: memref<8x1xi32, #tpu.memory_space<vmem>>, %arg4: memref<128x256xf32, #tpu.memory_space<vmem>>, %arg5: memref<1x256xf32, #tpu.memory_space<vmem>>, %arg6: memref<1x256xi32, #tpu.memory_space<vmem>>, %arg7: memref<8x128xf32, #tpu.memory_space<vmem>>, %arg8: memref<8x128xf32, #tpu.memory_space<vmem>>, %arg9: memref<8x1xf32, #tpu.memory_space<vmem>>, %arg10: memref<8x1xf32, #tpu.memory_space<vmem>>) attributes {dimension_semantics = [#tpu.dimension_semantics<parallel>, #tpu.dimension_semantics<arbitrary>], iteration_bounds = array<i64: 1, 1>, scalar_prefetch = 0 : i64, scratch_operands = 2 : i64, tpu.core_type = #tpu.core_type<tc>, window_params = [{transform_indices = @transform_0, window_bounds = array<i64: 8, 128>}, {transform_indices = @transform_1, window_bounds = array<i64: 8, 1>}, {transform_indices = @transform_2, window_bounds = array<i64: 128, 256>}, {transform_indices = @transform_3, window_bounds = array<i64: 1, 256>}, {transform_indices = @transform_4, window_bounds = array<i64: 1, 256>}, {transform_indices = @transform_5, window_bounds = array<i64: 8, 128>}, {transform_indices = @transform_6, window_bounds = array<i64: 8, 128>}]} {
    %c0_i32 = arith.constant 0 : i32
    %0 = arith.cmpi eq, %arg1, %c0_i32 : i32
    %1 = arith.extui %0 : i1 to i32
    %c0_i32_0 = arith.constant 0 : i32
    %2 = arith.cmpi ne, %1, %c0_i32_0 : i32
    scf.if %2 {
      %cst_26 = arith.constant 0xFF800000 : f32
      %39 = vector.broadcast %cst_26 : f32 to vector<8x1xf32>
      %c0_27 = arith.constant 0 : index
      %c0_28 = arith.constant 0 : index
      %40 = vector.load %arg9[%c0_27, %c0_28] : memref<8x1xf32, #tpu.memory_space<vmem>>, vector<8x1xf32>
      tpu.vector_store %arg9[%c0_27, %c0_28], %39 {strides = array<i32>} : memref<8x1xf32, #tpu.memory_space<vmem>>, vector<8x1xf32>,
      %cst_29 = arith.constant 0x7F800000 : f32
      %41 = vector.broadcast %cst_29 : f32 to vector<8x1xf32>
      %c0_30 = arith.constant 0 : index
      %c0_31 = arith.constant 0 : index
      %42 = vector.load %arg10[%c0_30, %c0_31] : memref<8x1xf32, #tpu.memory_space<vmem>>, vector<8x1xf32>
      tpu.vector_store %arg10[%c0_30, %c0_31], %41 {strides = array<i32>} : memref<8x1xf32, #tpu.memory_space<vmem>>, vector<8x1xf32>,
    } else {
    }
    %c0 = arith.constant 0 : index
    %c0_1 = arith.constant 0 : index
    %3 = vector.load %arg2[%c0, %c0_1] : memref<8x128xf32, #tpu.memory_space<vmem>>, vector<8x128xf32>
    %c0_2 = arith.constant 0 : index
    %c0_3 = arith.constant 0 : index
    %4 = vector.load %arg3[%c0_2, %c0_3] : memref<8x1xi32, #tpu.memory_space<vmem>>, vector<8x1xi32>
    %c0_4 = arith.constant 0 : index
    %c0_5 = arith.constant 0 : index
    %5 = vector.load %arg4[%c0_4, %c0_5] : memref<128x256xf32, #tpu.memory_space<vmem>>, vector<128x256xf32>
    %c0_6 = arith.constant 0 : index
    %c0_7 = arith.constant 0 : index
    %6 = vector.load %arg5[%c0_6, %c0_7] : memref<1x256xf32, #tpu.memory_space<vmem>>, vector<1x256xf32>
    %c0_8 = arith.constant 0 : index
    %c0_9 = arith.constant 0 : index
    %7 = vector.load %arg6[%c0_8, %c0_9] : memref<1x256xi32, #tpu.memory_space<vmem>>, vector<1x256xi32>
    %c0_i32_10 = arith.constant 0 : i32
    %8 = vector.broadcast %c0_i32_10 : i32 to vector<1x256xi32>
    %9 = arith.cmpi sgt, %7, %8 : vector<1x256xi32>
    %cst = arith.constant dense<0.000000e+00> : vector<8x256xf32>
    %10 = tpu.matmul %3, %5, %cst {dimension_numbers = #tpu.dot_dimension_numbers<[1], [0], [0], [1], [0, 0, 1, 1], [], []>} : vector<8x128xf32>, vector<128x256xf32>, vector<8x256xf32> -> vector<8x256xf32>
    %11 = vector.broadcast %6 : vector<1x256xf32> to vector<8x256xf32>
    %12 = arith.addf %11, %10 : vector<8x256xf32>
    %c256_i32 = arith.constant 256 : i32
    %13 = arith.muli %arg1, %c256_i32 : i32
    %14 = tpu.iota {dimensions = array<i32: 1>} : vector<8x256xi32>
    %15 = vector.broadcast %13 : i32 to vector<8x256xi32>
    %16 = arith.addi %15, %14 : vector<8x256xi32>
    %17 = vector.broadcast %4 : vector<8x1xi32> to vector<8x256xi32>
    %18 = arith.cmpi eq, %17, %16 : vector<8x256xi32>
    %cst_11 = arith.constant dense<true> : vector<8x256xi1>
    %19 = arith.xori %18, %cst_11 : vector<8x256xi1>
    %20 = vector.broadcast %9 : vector<1x256xi1> to vector<8x256xi1>
    %21 = arith.andi %20, %19 : vector<8x256xi1>
    %c0_12 = arith.constant 0 : index
    %c0_13 = arith.constant 0 : index
    %22 = vector.load %arg9[%c0_12, %c0_13] : memref<8x1xf32, #tpu.memory_space<vmem>>, vector<8x1xf32>
    %cst_14 = arith.constant 0xFF800000 : f32
    %23 = vector.broadcast %cst_14 : f32 to vector<8x256xf32>
    %24 = arith.select %18, %12, %23 : vector<8x256xi1>, vector<8x256xf32>
    %cst_15 = arith.constant dense<0xFF800000> : vector<8xf32>
    %25 = vector.multi_reduction <maximumf>, %24, %cst_15 [1] : vector<8x256xf32> to vector<8xf32>
    %26 = vector.shape_cast %25 : vector<8xf32> to vector<8x1xf32>
    %27 = arith.maximumf %22, %26 : vector<8x1xf32>
    %c0_16 = arith.constant 0 : index
    %c0_17 = arith.constant 0 : index
    %28 = vector.load %arg9[%c0_16, %c0_17] : memref<8x1xf32, #tpu.memory_space<vmem>>, vector<8x1xf32>
    tpu.vector_store %arg9[%c0_16, %c0_17], %27 {strides = array<i32>} : memref<8x1xf32, #tpu.memory_space<vmem>>, vector<8x1xf32>,
    %c0_18 = arith.constant 0 : index
    %c0_19 = arith.constant 0 : index
    %29 = vector.load %arg10[%c0_18, %c0_19] : memref<8x1xf32, #tpu.memory_space<vmem>>, vector<8x1xf32>
    %cst_20 = arith.constant 0x7F800000 : f32
    %30 = vector.broadcast %cst_20 : f32 to vector<8x256xf32>
    %31 = arith.select %21, %12, %30 : vector<8x256xi1>, vector<8x256xf32>
    %cst_21 = arith.constant dense<0x7F800000> : vector<8xf32>
    %32 = vector.multi_reduction <minimumf>, %31, %cst_21 [1] : vector<8x256xf32> to vector<8xf32>
    %33 = vector.shape_cast %32 : vector<8xf32> to vector<8x1xf32>
    %34 = arith.minimumf %29, %33 : vector<8x1xf32>
    %c0_22 = arith.constant 0 : index
    %c0_23 = arith.constant 0 : index
    %35 = vector.load %arg10[%c0_22, %c0_23] : memref<8x1xf32, #tpu.memory_space<vmem>>, vector<8x1xf32>
    tpu.vector_store %arg10[%c0_22, %c0_23], %34 {strides = array<i32>} : memref<8x1xf32, #tpu.memory_space<vmem>>, vector<8x1xf32>,
    %c0_i32_24 = arith.constant 0 : i32
    %36 = arith.cmpi eq, %arg1, %c0_i32_24 : i32
    %37 = arith.extui %36 : i1 to i32
    %c0_i32_25 = arith.constant 0 : i32
    %38 = arith.cmpi ne, %37, %c0_i32_25 : i32
    scf.if %38 {
      %39 = arith.mulf %3, %3 : vector<8x128xf32>
      %cst_26 = arith.constant dense<0.000000e+00> : vector<8xf32>
      %40 = vector.multi_reduction <add>, %39, %cst_26 [1] : vector<8x128xf32> to vector<8xf32>
      %41 = vector.shape_cast %40 : vector<8xf32> to vector<8x1xf32>
      %c0_i32_27 = arith.constant 0 : i32
      %42 = vector.broadcast %c0_i32_27 : i32 to vector<8x1xi32>
      %43 = arith.cmpi sge, %4, %42 : vector<8x1xi32>
      %c0_28 = arith.constant 0 : index
      %c0_29 = arith.constant 0 : index
      %44 = vector.load %arg9[%c0_28, %c0_29] : memref<8x1xf32, #tpu.memory_space<vmem>>, vector<8x1xf32>
      %45 = arith.addf %44, %41 : vector<8x1xf32>
      %cst_30 = arith.constant 9.99999996E-13 : f32
      %46 = vector.broadcast %cst_30 : f32 to vector<8x1xf32>
      %47 = arith.maximumf %45, %46 : vector<8x1xf32>
      %48 = math.sqrt %47 : vector<8x1xf32>
      %c0_31 = arith.constant 0 : index
      %c0_32 = arith.constant 0 : index
      %49 = vector.load %arg10[%c0_31, %c0_32] : memref<8x1xf32, #tpu.memory_space<vmem>>, vector<8x1xf32>
      %50 = arith.addf %49, %41 : vector<8x1xf32>
      %cst_33 = arith.constant 9.99999996E-13 : f32
      %51 = vector.broadcast %cst_33 : f32 to vector<8x1xf32>
      %52 = arith.maximumf %50, %51 : vector<8x1xf32>
      %53 = math.sqrt %52 : vector<8x1xf32>
      %54 = arith.subf %48, %53 : vector<8x1xf32>
      %cst_34 = arith.constant 0.000000e+00 : f32
      %55 = vector.broadcast %cst_34 : f32 to vector<8x1xf32>
      %56 = arith.addf %54, %55 : vector<8x1xf32>
      %cst_35 = arith.constant 0.000000e+00 : f32
      %57 = vector.broadcast %cst_35 : f32 to vector<8x1xf32>
      %58 = arith.maximumf %56, %57 : vector<8x1xf32>
      %cst_36 = arith.constant 0.000000e+00 : f32
      %59 = vector.broadcast %cst_36 : f32 to vector<8x1xf32>
      %60 = arith.select %43, %58, %59 : vector<8x1xi1>, vector<8x1xf32>
      %61 = arith.subf %53, %48 : vector<8x1xf32>
      %cst_37 = arith.constant 0.000000e+00 : f32
      %62 = vector.broadcast %cst_37 : f32 to vector<8x1xf32>
      %63 = arith.select %43, %61, %62 : vector<8x1xi1>, vector<8x1xf32>
      %64 = vector.shape_cast %60 : vector<8x1xf32> to vector<1x8x1xf32>
      %cst_38 = arith.constant dense<0.000000e+00> : vector<1xf32>
      %65 = vector.multi_reduction <add>, %64, %cst_38 [1, 2] : vector<1x8x1xf32> to vector<1xf32>
      %66 = vector.shape_cast %65 : vector<1xf32> to vector<1x1x1xf32>
      %67 = vector.extract %66[0, 0, 0] : f32 from vector<1x1x1xf32>
      %cst_39 = arith.constant 1.250000e-01 : f32
      %68 = arith.mulf %67, %cst_39 : f32
      %69 = vector.shape_cast %63 : vector<8x1xf32> to vector<1x8x1xf32>
      %cst_40 = arith.constant dense<0.000000e+00> : vector<1xf32>
      %70 = vector.multi_reduction <add>, %69, %cst_40 [1, 2] : vector<1x8x1xf32> to vector<1xf32>
      %71 = vector.shape_cast %70 : vector<1xf32> to vector<1x1x1xf32>
      %72 = vector.extract %71[0, 0, 0] : f32 from vector<1x1x1xf32>
      %cst_41 = arith.constant 1.250000e-01 : f32
      %73 = arith.mulf %72, %cst_41 : f32
      %74 = tpu.iota {dimensions = array<i32: 0>} : vector<8x128xi32>
      %c0_i32_42 = arith.constant 0 : i32
      %75 = vector.broadcast %c0_i32_42 : i32 to vector<8x128xi32>
      %76 = arith.cmpi eq, %74, %75 : vector<8x128xi32>
      %77 = tpu.iota {dimensions = array<i32: 1>} : vector<8x128xi32>
      %c0_i32_43 = arith.constant 0 : i32
      %78 = vector.broadcast %c0_i32_43 : i32 to vector<8x128xi32>
      %79 = arith.cmpi eq, %77, %78 : vector<8x128xi32>
      %80 = arith.andi %76, %79 : vector<8x128xi1>
      %cst_44 = arith.constant 0.000000e+00 : f32
      %81 = vector.broadcast %68 : f32 to vector<8x128xf32>
      %82 = vector.broadcast %cst_44 : f32 to vector<8x128xf32>
      %83 = arith.select %80, %81, %82 : vector<8x128xi1>, vector<8x128xf32>
      %c0_45 = arith.constant 0 : index
      %c0_46 = arith.constant 0 : index
      %84 = vector.load %arg7[%c0_45, %c0_46] : memref<8x128xf32, #tpu.memory_space<vmem>>, vector<8x128xf32>
      tpu.vector_store %arg7[%c0_45, %c0_46], %83 {strides = array<i32>} : memref<8x128xf32, #tpu.memory_space<vmem>>, vector<8x128xf32>,
      %cst_47 = arith.constant 0.000000e+00 : f32
      %85 = vector.broadcast %73 : f32 to vector<8x128xf32>
      %86 = vector.broadcast %cst_47 : f32 to vector<8x128xf32>
      %87 = arith.select %80, %85, %86 : vector<8x128xi1>, vector<8x128xf32>
      %c0_48 = arith.constant 0 : index
      %c0_49 = arith.constant 0 : index
      %88 = vector.load %arg8[%c0_48, %c0_49] : memref<8x128xf32, #tpu.memory_space<vmem>>, vector<8x128xf32>
      tpu.vector_store %arg8[%c0_48, %c0_49], %87 {strides = array<i32>} : memref<8x128xf32, #tpu.memory_space<vmem>>, vector<8x128xf32>,
    } else {
    }
    return
  }
  func.func @transform_0(%arg0: i32, %arg1: i32) -> (i32, i32) {
    %c0_i32 = arith.constant 0 : i32
    %c0_i32_0 = arith.constant 0 : i32
    return %arg0, %c0_i32 : i32, i32
  }
  func.func @transform_1(%arg0: i32, %arg1: i32) -> (i32, i32) {
    %c0_i32 = arith.constant 0 : i32
    %c0_i32_0 = arith.constant 0 : i32
    return %arg0, %c0_i32 : i32, i32
  }
  func.func @transform_2(%arg0: i32, %arg1: i32) -> (i32, i32) {
    %c0_i32 = arith.constant 0 : i32
    %c0_i32_0 = arith.constant 0 : i32
    return %c0_i32, %arg1 : i32, i32
  }
  func.func @transform_3(%arg0: i32, %arg1: i32) -> (i32, i32) {
    %c0_i32 = arith.constant 0 : i32
    %c0_i32_0 = arith.constant 0 : i32
    return %c0_i32, %arg1 : i32, i32
  }
  func.func @transform_4(%arg0: i32, %arg1: i32) -> (i32, i32) {
    %c0_i32 = arith.constant 0 : i32
    %c0_i32_0 = arith.constant 0 : i32
    return %c0_i32, %arg1 : i32, i32
  }
  func.func @transform_5(%arg0: i32, %arg1: i32) -> (i32, i32) {
    %c0_i32 = arith.constant 0 : i32
    %c0_i32_0 = arith.constant 0 : i32
    return %arg0, %c0_i32 : i32, i32
  }
  func.func @transform_6(%arg0: i32, %arg1: i32) -> (i32, i32) {
    %c0_i32 = arith.constant 0 : i32
    %c0_i32_0 = arith.constant 0 : i32
    return %arg0, %c0_i32 : i32, i32
  }
}

</mosaic_0001>

<llo_original>
// kernel: tpu_custom_call.1
$region0: #{tpu_custom_call.1}
  #allocation0 [shape = 'u32[]', space=smem, size = 0x4, offset = 0x4, fixed_abs, tag = 'smem constant byte address 0x4 - core index']
  #allocation1 [shape = 'u32[144,128]{1,0:T(1,128)}', space=vmem, size = 0x12000, scoped, tag = 'internal scratch']
  #allocation2 [shape = 'f32[8,1]{1,0:T(8,128)}', space=vmem, size = 0x1000, scoped, tag = 'scratch operand']
  #allocation3 [shape = 'f32[8,1]{1,0:T(8,128)}', space=vmem, size = 0x1000, scoped, tag = 'scratch operand']
  %s0 = inlined_call_operand.vmem [shape: f32[8,128], index: 0, kind: input, shape index: {}]
  %s1 = inlined_call_operand.vmem [shape: s32[8,1], index: 1, kind: input, shape index: {}]
  %s2 = inlined_call_operand.hbm [shape: f32[128,256], index: 2, kind: input, shape index: {}]
  %s3 = inlined_call_operand.vmem [shape: f32[1,256], index: 3, kind: input, shape index: {}]
  %s4 = inlined_call_operand.vmem [shape: s32[1,256], index: 4, kind: input, shape index: {}]
  %s5 = inlined_call_operand.hbm [shape: f32[8,128], index: 5, kind: output, shape index: {0}]
  %s6 = inlined_call_operand.hbm [shape: f32[8,128], index: 6, kind: output, shape index: {1}]
  %7 = xla_tuple %s5, %s6
  %s8 = sld [smem:[#allocation0]]
  $region50: #{tpu_custom_call.1} parent=0
    _
  %s10 = ssub.s32 1, %s8
  %s11 = scalar_select 0, %s10, %s8
  $region1: #{tpu_custom_call.1} parent=0
    #allocation4 [shape = 'u8[131072]{0}', space=vmem, size = 0x20000, scoped, tag = 'input window, operand 2, single buffered']
    #allocation5 [shape = 's32[1]{0}', space=sflag, size = 0x4, scoped, tag = 'scoped memory for tpu_custom_call.1']
    #allocation6 [shape = 's32[1]{0}', space=sflag, size = 0x4, scoped, tag = 'scoped memory for tpu_custom_call.1']
    #allocation7 [shape = 'u8[4096]{0}', space=vmem, size = 0x1000, scoped, tag = 'output window, operand 0, single buffered']
    #allocation8 [shape = 'u8[4096]{0}', space=vmem, size = 0x1000, scoped, tag = 'output window, operand 1, single buffered']
    #allocation9 [shape = 's32[1]{0}', space=sflag, size = 0x4, scoped, tag = 'scoped memory for tpu_custom_call.1']
    %12 = vsyncpa [#allocation5], 0
    %13 = vsyncpa [#allocation6], 0
    %14 = vsyncpa [#allocation9], 0
    // Predicated region
    $region2: #{tpu_custom_call.1} parent=1 // pred_check
      _
    $region3: #{tpu_custom_call.1} parent=1 // pred_check_branch
      %16 = sbr.rel (0) target = $region5
    $region4: #{tpu_custom_call.1} parent=1 // pred_region
      _
    $region5: #{tpu_custom_call.1} parent=1 // pred_fallthru
      _
    // Predicated region
    $region6: #{tpu_custom_call.1} parent=1 // pred_check
      _
    $region7: #{tpu_custom_call.1} parent=1 // pred_check_branch
      %18 = sbr.rel (0) target = $region9
    $region8: #{tpu_custom_call.1} parent=1 // pred_region
      _
    $region9: #{tpu_custom_call.1} parent=1 // pred_fallthru
      _
    // Predicated region
    $region10: #{tpu_custom_call.1} parent=1 // pred_check
      _
    $region11: #{tpu_custom_call.1} parent=1 // pred_check_branch
      %20 = sbr.rel (0) target = $region13
    $region12: #{tpu_custom_call.1} parent=1 // pred_region
      %s22 = ssub.s32 4096, 4096
      %23 = vsyncadd [#allocation5], %s22
      %s24 = sshll.u32 [#allocation4], 4
      %s25 = int_to_ptr.vmem [resolvable:$true] %s24
      %30 = dma.hbm_to_vmem [thread:$0]  %s2, 4096, %s25, [#allocation5], 256, 256, 16
    $region13: #{tpu_custom_call.1} parent=1 // pred_fallthru
      _
    // Predicated region
    $region14: #{tpu_custom_call.1} parent=1 // pred_check
      _
    $region15: #{tpu_custom_call.1} parent=1 // pred_check_branch
      %32 = sbr.rel (0) target = $region17
    $region16: #{tpu_custom_call.1} parent=1 // pred_region
      _
    $region17: #{tpu_custom_call.1} parent=1 // pred_fallthru
      _
    // Predicated region
    $region18: #{tpu_custom_call.1} parent=1 // pred_check
      _
    $region19: #{tpu_custom_call.1} parent=1 // pred_check_branch
      %34 = sbr.rel (0) target = $region21
    $region20: #{tpu_custom_call.1} parent=1 // pred_region
      _
    $region21: #{tpu_custom_call.1} parent=1 // pred_fallthru
      _
    // Predicated region
    $region22: #{tpu_custom_call.1} parent=1 // pred_check
      _
    $region23: #{tpu_custom_call.1} parent=1 // pred_check_branch
      %36 = sbr.rel (0) target = $region25
    $region24: #{tpu_custom_call.1} parent=1 // pred_region
      %37 = dma.done [#allocation5], 4096
    $region25: #{tpu_custom_call.1} parent=1 // pred_fallthru
      _
    %p38 = scmp.eq.s32.totalorder 0, 0
    // Predicated region
    $region26: #{tpu_custom_call.1} parent=1 // pred_check
      %p39 = pneg %p38
    $region27: #{tpu_custom_call.1} parent=1 // pred_check_branch
      %41 = sbr.rel (%p39) target = $region29
    $region28: #{tpu_custom_call.1} parent=1 // pred_region
      %vm42 = vcmask 7168
      %43 = vst.msk [vmem:[#allocation2] sm:$0xff] %vm42, -inf
      %44 = vst.msk [vmem:[#allocation3] sm:$0xff] %vm42, inf
    $region29: #{tpu_custom_call.1} parent=1 // pred_fallthru
      _
    %v45 = vld [vmem:[%s0] sm:$0xff]
    %v46 = vld [vmem:[%s1] sm:$0xff]
    %v47 = vld [vmem:[#allocation4] sm:$0xff]
    %v48 = vld [vmem:[#allocation4 + $0x8] sm:$0xff]
    %v49 = vld [vmem:[#allocation4 + $0x10] sm:$0xff]
    %v50 = vld [vmem:[#allocation4 + $0x18] sm:$0xff]
    %v51 = vld [vmem:[#allocation4 + $0x20] sm:$0xff]
    %v52 = vld [vmem:[#allocation4 + $0x28] sm:$0xff]
    %v53 = vld [vmem:[#allocation4 + $0x30] sm:$0xff]
    %v54 = vld [vmem:[#allocation4 + $0x38] sm:$0xff]
    %v55 = vld [vmem:[#allocation4 + $0x40] sm:$0xff]
    %v56 = vld [vmem:[#allocation4 + $0x48] sm:$0xff]
    %v57 = vld [vmem:[#allocation4 + $0x50] sm:$0xff]
    %v58 = vld [vmem:[#allocation4 + $0x58] sm:$0xff]
    %v59 = vld [vmem:[#allocation4 + $0x60] sm:$0xff]
    %v60 = vld [vmem:[#allocation4 + $0x68] sm:$0xff]
    %v61 = vld [vmem:[#allocation4 + $0x70] sm:$0xff]
    %v62 = vld [vmem:[#allocation4 + $0x78] sm:$0xff]
    %v63 = vld [vmem:[#allocation4 + $0x80] sm:$0xff]
    %v64 = vld [vmem:[#allocation4 + $0x88] sm:$0xff]
    %v65 = vld [vmem:[#allocation4 + $0x90] sm:$0xff]
    %v66 = vld [vmem:[#allocation4 + $0x98] sm:$0xff]
    %v67 = vld [vmem:[#allocation4 + $0xa0] sm:$0xff]
    %v68 = vld [vmem:[#allocation4 + $0xa8] sm:$0xff]
    %v69 = vld [vmem:[#allocation4 + $0xb0] sm:$0xff]
    %v70 = vld [vmem:[#allocation4 + $0xb8] sm:$0xff]
    %v71 = vld [vmem:[#allocation4 + $0xc0] sm:$0xff]
    %v72 = vld [vmem:[#allocation4 + $0xc8] sm:$0xff]
    %v73 = vld [vmem:[#allocation4 + $0xd0] sm:$0xff]
    %v74 = vld [vmem:[#allocation4 + $0xd8] sm:$0xff]
    %v75 = vld [vmem:[#allocation4 + $0xe0] sm:$0xff]
    %v76 = vld [vmem:[#allocation4 + $0xe8] sm:$0xff]
    %v77 = vld [vmem:[#allocation4 + $0xf0] sm:$0xff]
    %v78 = vld [vmem:[#allocation4 + $0xf8] sm:$0xff]
    %v79 = vld [vmem:[%s3] sm:$0x3]
    %v80 = vld [vmem:[%s4] sm:$0x3]
    %vm81 = vcmp.gt.s32.totalorder %v80, 0
    %82 = vmatprep.subr.mxu0 %v48
    %83 = vmatpush1.msra.mxu0 %v47
    %84 = vmatprep.subr.mxu0 %v50
    %85 = vmatpush1.msra.mxu0 %v49
    %86 = vmatprep.subr.mxu0 %v52
    %87 = vmatpush1.msra.mxu0 %v51
    %88 = vmatprep.subr.mxu0 %v54
    %89 = vmatpush1.msra.mxu0 %v53
    %90 = vmatprep.subr.mxu0 %v56
    %91 = vmatpush1.msra.mxu0 %v55
    %92 = vmatprep.subr.mxu0 %v58
    %93 = vmatpush1.msra.mxu0 %v57
    %94 = vmatprep.subr.mxu0 %v60
    %95 = vmatpush1.msra.mxu0 %v59
    %96 = vmatprep.subr.mxu0 %v62
    %97 = vmatpush1.msra.mxu0 %v61
    %98 = vmatprep.subr.mxu0 %v64
    %99 = vmatpush1.msra.mxu0 %v63
    %100 = vmatprep.subr.mxu0 %v66
    %101 = vmatpush1.msra.mxu0 %v65
    %102 = vmatprep.subr.mxu0 %v68
    %103 = vmatpush1.msra.mxu0 %v67
    %104 = vmatprep.subr.mxu0 %v70
    %105 = vmatpush1.msra.mxu0 %v69
    %106 = vmatprep.subr.mxu0 %v72
    %107 = vmatpush1.msra.mxu0 %v71
    %108 = vmatprep.subr.mxu0 %v74
    %109 = vmatpush1.msra.mxu0 %v73
    %110 = vmatprep.subr.mxu0 %v76
    %111 = vmatpush1.msra.mxu0 %v75
    %112 = vmatprep.subr.mxu0 %v78
    %113 = vmatpush1.msra.mxu0 %v77
    %114 = vmatprep.subr.mxu0 0.0
    %115 = vmatpush1.msra.mxu0 0.0
    %116 = vmatprep.subr.mxu0 0.0
    %117 = vmatpush1.msra.mxu0 0.0
    %118 = vmatprep.subr.mxu0 0.0
    %119 = vmatpush1.msra.mxu0 0.0
    %120 = vmatprep.subr.mxu0 0.0
    %121 = vmatpush1.msra.mxu0 0.0
    %122 = vmatprep.subr.mxu0 0.0
    %123 = vmatpush1.msra.mxu0 0.0
    %124 = vmatprep.subr.mxu0 0.0
    %125 = vmatpush1.msra.mxu0 0.0
    %126 = vmatprep.subr.mxu0 0.0
    %127 = vmatpush1.msra.mxu0 0.0
    %128 = vmatprep.subr.mxu0 0.0
    %129 = vmatpush1.msra.mxu0 0.0
    %130 = vmatprep.subr.mxu0 0.0
    %131 = vmatpush1.msra.mxu0 0.0
    %132 = vmatprep.subr.mxu0 0.0
    %133 = vmatpush1.msra.mxu0 0.0
    %134 = vmatprep.subr.mxu0 0.0
    %135 = vmatpush1.msra.mxu0 0.0
    %136 = vmatprep.subr.mxu0 0.0
    %137 = vmatpush1.msra.mxu0 0.0
    %138 = vmatprep.subr.mxu0 0.0
    %139 = vmatpush1.msra.mxu0 0.0
    %140 = vmatprep.subr.mxu0 0.0
    %141 = vmatpush1.msra.mxu0 0.0
    %142 = vmatprep.subr.mxu0 0.0
    %143 = vmatpush1.msra.mxu0 0.0
    %144 = vmatprep.subr.mxu0 0.0
    %145 = vmatpush1.msra.mxu0 0.0
    %146 = vmatprep.mubr.f32.mxu0 0.0
    %147 = vmatmul.mubr.f32.gmra.mrb[0].mxu0 %v45
    %v148 = vpop.f32.mrb[0].mxu0
    %v149 = vadd.f32 0.0, %v148
    %v150 = vpop.f32.mrb[0].mxu0
    %v151 = vadd.f32 0.0, %v150
    %152 = vdwg.mxu0
    %v154 = vlaneseq
    %v155 = vshrl.u32 %v154, 7
    %v156 = vsub.s32 0, %v155
    %v157 = vrot.slane %v79, %v156
    %v158 = vlaneseq
    %v159 = vshrl.u32 %v158, 7
    %v160 = vsub.s32 1, %v159
    %v161 = vrot.slane %v79, %v160
    %v164 = vadd.f32 %v157, %v149
    %v165 = vadd.f32 %v161, %v151
    %s166 = smul.u32 0, 256
    %v167 = vlaneseq
    %v168 = vand.u32 %v167, 127
    %v169 = vadd.s32 %v168, 128
    %v170 = vstv %s166
    %v171 = vadd.s32 %v170, %v168
    %v172 = vadd.s32 %v170, %v169
    %173 = vset.pattern.permute.xlu0 0
    %174 = vperm.xlu0 %173, %v46
    %v175 = vpop.permute.xlu0 %174
    %vm176 = vcmp.eq.s32.totalorder %v175, %v171
    %vm177 = vcmp.eq.s32.totalorder %v175, %v172
    %vm178 = vmxor %vm176, 1
    %vm179 = vmxor %vm177, 1
    %v180 = vsel %vm81, 1, 0
    %v181 = vlaneseq
    %v182 = vshrl.u32 %v181, 7
    %v183 = vsub.s32 0, %v182
    %v184 = vrot.slane %v180, %v183
    %v185 = vlaneseq
    %v186 = vshrl.u32 %v185, 7
    %v187 = vsub.s32 1, %v186
    %v188 = vrot.slane %v180, %v187
    %vm189 = vcmp.eq.s32.totalorder %v184, 1
    %vm190 = vcmp.eq.s32.totalorder %v188, 1
    %vm191 = vmand %vm189, %vm178
    %vm192 = vmand %vm190, %vm179
    %v193 = vld [vmem:[#allocation2] sm:$0xff]
    %v194 = vsel %vm176, %v164, -inf
    %v195 = vsel %vm177, %v165, -inf
    %v196 = vmax.f32 %v194, %v195
    %197 = vmax.xlane.f32.xlu0 %v196
    %v198 = vpop.xlane.xlu0 %197
    %v199 = vmax.f32 %v193, %v198
    %vm200 = vcmask 7168
    %201 = vst.msk [vmem:[#allocation2] sm:$0xff] %vm200, %v199
    %v202 = vld [vmem:[#allocation3] sm:$0xff]
    %v203 = vsel %vm191, %v164, inf
    %v204 = vsel %vm192, %v165, inf
    %v205 = vmin.f32 %v203, %v204
    %206 = vmin.xlane.f32.xlu0 %v205
    %v207 = vpop.xlane.xlu0 %206
    %v208 = vmin.f32 %v202, %v207
    %209 = vst.msk [vmem:[#allocation3] sm:$0xff] %vm200, %v208
    // Predicated region
    $region30: #{tpu_custom_call.1} parent=1 // pred_check
      %p210 = pneg %p38
    $region31: #{tpu_custom_call.1} parent=1 // pred_check_branch
      %212 = sbr.rel (%p210) target = $region33
    $region32: #{tpu_custom_call.1} parent=1 // pred_region
      %v213 = vmul.f32 %v45, %v45
      %214 = vadd.xlane.f32.xlu0 %v213
      %v215 = vpop.xlane.xlu0 %214
      %vm216 = vcmp.ge.s32.totalorder %v46, 0
      %v217 = vld [vmem:[#allocation2] sm:$0xff]
      %v218 = vadd.f32 %v217, %v215
      %v219 = vmax.f32 %v218, 1e-12
      %v220 = vrsqrt.pop %v219
      %v221 = vmul.f32 %v219, %v220
      %vm222 = vcmp.eq.f32.partialorder %v219, inf
      %v223 = vsel %vm222, %v219, %v221
      %vm224 = vcmp.eq.f32.partialorder %v219, 0.0
      %v225 = vand.u32 %v219, 2147483648
      %v226 = vsel %vm224, %v225, %v223
      %v227 = vld [vmem:[#allocation3] sm:$0xff]
      %v228 = vadd.f32 %v227, %v215
      %v229 = vmax.f32 %v228, 1e-12
      %v230 = vrsqrt.pop %v229
      %v231 = vmul.f32 %v229, %v230
      %vm232 = vcmp.eq.f32.partialorder %v229, inf
      %v233 = vsel %vm232, %v229, %v231
      %vm234 = vcmp.eq.f32.partialorder %v229, 0.0
      %v235 = vand.u32 %v229, 2147483648
      %v236 = vsel %vm234, %v235, %v233
      %v237 = vsub.f32 %v226, %v236
      %v238 = vadd.f32 %v237, 0.0
      %v239 = vmax.f32 %v238, 0.0
      %v240 = vsel %vm216, %v239, 0.0
      %v241 = vsub.f32 %v236, %v226
      %v242 = vsel %vm216, %v241, 0.0
      %v243 = vsel %vm200, %v240, 0.0
      %244 = vadd.xlane.f32.xlu0 %v243
      %v245 = vpop.xlane.xlu0 %244
      %v246 = vrot.slane %v245, 4
      %v247 = vadd.f32 %v245, %v246
      %v248 = vrot.slane %v247, 2
      %v249 = vadd.f32 %v247, %v248
      %v250 = vrot.slane %v249, 1
      %v251 = vadd.f32 %v249, %v250
      %s252 = vtos %v251
      %s253 = smul.f32 %s252, 0.125
      %v254 = vsel %vm200, %v242, 0.0
      %255 = vadd.xlane.f32.xlu0 %v254
      %v256 = vpop.xlane.xlu0 %255
      %v257 = vrot.slane %v256, 4
      %v258 = vadd.f32 %v256, %v257
      %v259 = vrot.slane %v258, 2
      %v260 = vadd.f32 %v258, %v259
      %v261 = vrot.slane %v260, 1
      %v262 = vadd.f32 %v260, %v261
      %s263 = vtos %v262
      %s264 = smul.f32 %s263, 0.125
      %v265 = vlaneseq
      %v266 = vshrl.u32 %v265, 7
      %vm267 = vcmp.eq.s32.totalorder %v266, 0
      %vm268 = vcmp.eq.s32.totalorder %v168, 0
      %vm269 = vmand %vm267, %vm268
      %v270 = vstv %s253
      %v271 = vsel %vm269, %v270, 0.0
      %272 = vst [vmem:[#allocation7] sm:$0xff] %v271
      %v273 = vstv %s264
      %v274 = vsel %vm269, %v273, 0.0
      %275 = vst [vmem:[#allocation8] sm:$0xff] %v274
    $region33: #{tpu_custom_call.1} parent=1 // pred_fallthru
      _
    // Predicated region
    $region34: #{tpu_custom_call.1} parent=1 // pred_check
      _
    $region35: #{tpu_custom_call.1} parent=1 // pred_check_branch
      %277 = sbr.rel (0) target = $region37
    $region36: #{tpu_custom_call.1} parent=1 // pred_region
      %s279 = ssub.s32 128, 128
      %280 = vsyncadd [#allocation6], %s279
      %s282 = sshll.u32 [#allocation7], 4
      %s283 = int_to_ptr.vmem [resolvable:$true] %s282
      %285 = dma.vmem_to_hbm [thread:$0]  %s283, 128, %s5, [#allocation6]
    $region37: #{tpu_custom_call.1} parent=1 // pred_fallthru
      _
    // Predicated region
    $region38: #{tpu_custom_call.1} parent=1 // pred_check
      _
    $region39: #{tpu_custom_call.1} parent=1 // pred_check_branch
      %287 = sbr.rel (0) target = $region41
    $region40: #{tpu_custom_call.1} parent=1 // pred_region
      %s289 = ssub.s32 128, 128
      %290 = vsyncadd [#allocation9], %s289
      %s292 = sshll.u32 [#allocation8], 4
      %s293 = int_to_ptr.vmem [resolvable:$true] %s292
      %295 = dma.vmem_to_hbm [thread:$0]  %s293, 128, %s6, [#allocation9]
    $region41: #{tpu_custom_call.1} parent=1 // pred_fallthru
      _
    // Predicated region
    $region42: #{tpu_custom_call.1} parent=1 // pred_check
      _
    $region43: #{tpu_custom_call.1} parent=1 // pred_check_branch
      %297 = sbr.rel (0) target = $region45
    $region44: #{tpu_custom_call.1} parent=1 // pred_region
      %298 = dma.done [#allocation6], 128
    $region45: #{tpu_custom_call.1} parent=1 // pred_fallthru
      _
    // Predicated region
    $region46: #{tpu_custom_call.1} parent=1 // pred_check
      _
    $region47: #{tpu_custom_call.1} parent=1 // pred_check_branch
      %300 = sbr.rel (0) target = $region49
    $region48: #{tpu_custom_call.1} parent=1 // pred_region
      %301 = dma.done [#allocation9], 128
    $region49: #{tpu_custom_call.1} parent=1 // pred_fallthru
      _
    %302 = vsyncpa [#allocation5], 1
    %303 = vsyncpa [#allocation6], 1
    %304 = vsyncpa [#allocation9], 1

</llo_original>
